<compile_context>
chip_gen: v7x
topology: tpu7x:2x2x1
jax: 0.10.0
libtpu: 0.0.40
codegen_flags: <defaults>
</compile_context>

<pallas_src>
import math
import functools

import jax
import jax.numpy as jnp
from jax import lax
from jax.experimental import pallas as pl
from jax.experimental.pallas import tpu as pltpu


def _round_up(x, m):
    return ((x + m - 1) // m) * m


def _lstm_recurrence_kernel(xp_ref, whh_ref, out_ref, h_ref, c_ref,
                            *, chunk, hidden, matmul_dtype):
    """One grid step = `chunk` timesteps of the LSTM recurrence for one batch tile.

    xp_ref : (TC, BT, 4H)  precomputed x_t @ W_ih + (b_ih + b_hh)
    whh_ref: (H, 4H)       recurrent weights (constant index_map -> resident)
    out_ref: (TC, BT, H)   hidden outputs for this chunk
    h_ref  : (BT, H)       VMEM scratch, carried hidden state
    c_ref  : (BT, H)       VMEM scratch, carried cell state
    Grid = (batch_tiles [parallel], time_chunks [arbitrary, sequential]).
    """
    # New batch tile (time-chunk index 0) -> reset carried state to zeros.
    @pl.when(pl.program_id(1) == 0)
    def _():
        h_ref[...] = jnp.zeros_like(h_ref)
        c_ref[...] = jnp.zeros_like(c_ref)

    whh = whh_ref[...].astype(matmul_dtype)   # load/cast weights once per chunk

    h = h_ref[...]
    c = c_ref[...]

    # Static (fully unrolled) inner loop over the time chunk: all slices are
    # static, h/c stay in vregs, and the LLO scheduler sees the whole chunk.
    for t in range(chunk):
        gates = xp_ref[t] + jnp.dot(h.astype(matmul_dtype), whh,
                                    preferred_element_type=jnp.float32)
        i_g = jax.nn.sigmoid(gates[:, 0 * hidden:1 * hidden])
        f_g = jax.nn.sigmoid(gates[:, 1 * hidden:2 * hidden])
        g_g = jnp.tanh(gates[:, 2 * hidden:3 * hidden])
        o_g = jax.nn.sigmoid(gates[:, 3 * hidden:4 * hidden])
        c = f_g * c + i_g * g_g
        h = o_g * jnp.tanh(c)
        out_ref[t] = h.astype(out_ref.dtype)

    h_ref[...] = h
    c_ref[...] = c


def _lstm_layer_recurrence(x_proj_tm, w_hh, *, chunk, batch_tile, matmul_dtype):
    """Run the sequential part of one LSTM layer over time-major projected inputs.

    x_proj_tm : (T_pad, B_pad, 4H) float32 (already includes bias)
    w_hh      : (H, 4H) float32
    returns   : (T_pad, B_pad, H) float32 time-major hidden states
    """
    T_pad, B_pad, G = x_proj_tm.shape
    H = w_hh.shape[0]
    assert G == 4 * H and T_pad % chunk == 0 and B_pad % batch_tile == 0

    nt = T_pad // chunk
    nb = B_pad // batch_tile

    kernel = functools.partial(_lstm_recurrence_kernel,
                               chunk=chunk, hidden=H, matmul_dtype=matmul_dtype)

    # Scoped-VMEM budget: double-buffered in/out chunks + weight buffers + h/c.
    itemsize = 4
    vmem_bytes = itemsize * (2 * chunk * batch_tile * 5 * H   # in (4H) + out (H), x2 buffers
                             + 2 * H * 4 * H                  # W_hh buffers
                             + 2 * batch_tile * H)            # h, c scratch
    vmem_limit = int(min(max(4 * vmem_bytes, 16 << 20), 48 << 20))

    return pl.pallas_call(
        kernel,
        out_shape=jax.ShapeDtypeStruct((T_pad, B_pad, H), jnp.float32),
        grid_spec=pltpu.PrefetchScalarGridSpec(
            num_scalar_prefetch=0,
            grid=(nb, nt),
            in_specs=[
                pl.BlockSpec((chunk, batch_tile, 4 * H), lambda b, t: (t, b, 0)),
                pl.BlockSpec((H, 4 * H), lambda b, t: (0, 0)),   # resident W_hh
            ],
            out_specs=pl.BlockSpec((chunk, batch_tile, H), lambda b, t: (t, b, 0)),
            scratch_shapes=[
                pltpu.VMEM((batch_tile, H), jnp.float32),  # h state
                pltpu.VMEM((batch_tile, H), jnp.float32),  # c state
            ],
        ),
        compiler_params=pltpu.CompilerParams(
            dimension_semantics=("parallel", "arbitrary"),
            vmem_limit_bytes=vmem_limit,
        ),
    )(x_proj_tm, w_hh)


def init_lstm4graph_params(key, input_size, hidden_size, num_layers):
    """Deterministic parameter init mimicking nn.LSTM's U(-1/sqrt(H), 1/sqrt(H)).

    Weights are stored transposed vs. PyTorch ((in_dim, 4H) / (H, 4H)) so all
    matmuls are plain x @ W, and the two biases are pre-combined.
    """
    params = []
    stdv = 1.0 / math.sqrt(hidden_size)
    in_dim = input_size
    for _ in range(num_layers):
        key, k1, k2, k3, k4 = jax.random.split(key, 5)
        w_ih = jax.random.uniform(k1, (in_dim, 4 * hidden_size),
                                  jnp.float32, -stdv, stdv)
        w_hh = jax.random.uniform(k2, (hidden_size, 4 * hidden_size),
                                  jnp.float32, -stdv, stdv)
        b_ih = jax.random.uniform(k3, (4 * hidden_size,), jnp.float32, -stdv, stdv)
        b_hh = jax.random.uniform(k4, (4 * hidden_size,), jnp.float32, -stdv, stdv)
        params.append((w_ih, w_hh, b_ih + b_hh))
        in_dim = hidden_size
    return params


def lstm4graph_forward(x_bf, params, *, chunk=None, matmul_dtype=jnp.float32):
    """x_bf: (B, T, input_size) batch-first, as in the PyTorch module.

    Returns (num_layers, B, T, hidden_size) = torch.stack(per-layer outputs, dim=0).
    """
    B, T, _ = x_bf.shape
    H = params[0][1].shape[0]

    # Pad batch to sublane multiple (>= 8); tile at 128 rows for very large B.
    B_pad = max(8, _round_up(B, 8))
    if B_pad > 128:
        B_pad = _round_up(B_pad, 128)
        batch_tile = 128
    else:
        batch_tile = B_pad

    # Time chunk per grid step (fully unrolled in-kernel); pad T to a multiple.
    if chunk is None:
        chunk = min(T, 32)
    T_pad = _round_up(T, chunk)

    x = jnp.pad(x_bf.astype(jnp.float32),
                ((0, B_pad - B), (0, T_pad - T), (0, 0)))
    x_tm = jnp.transpose(x, (1, 0, 2))            # (T_pad, B_pad, D) time-major

    outputs_tm = []
    for (w_ih, w_hh, bias) in params:
        D_in = w_ih.shape[0]
        # Hoisted input projection: ONE large MXU-dense matmul per layer.
        x_flat = x_tm.reshape(T_pad * B_pad, D_in)
        x_proj = (jnp.dot(x_flat.astype(matmul_dtype), w_ih.astype(matmul_dtype),
                          preferred_element_type=jnp.float32)
                  + bias[None, :]).reshape(T_pad, B_pad, 4 * H)
        x_tm = _lstm_layer_recurrence(x_proj, w_hh,
                                      chunk=chunk, batch_tile=batch_tile,
                                      matmul_dtype=matmul_dtype)
        outputs_tm.append(x_tm)                   # stays time-major between layers

    out = jnp.stack(outputs_tm, axis=0)           # (L, T_pad, B_pad, H)
    out = out[:, :T, :B, :]                       # drop time/batch padding
    return jnp.transpose(out, (0, 2, 1, 3))       # single final transpose -> (L, B, T, H)


def _lstm_reference(x_bf, params):
    """Pure-JAX reference (lax.scan), identical math, for a correctness check."""
    outs = []
    x = x_bf
    for (w_ih, w_hh, bias) in params:
        B = x.shape[0]
        H = w_hh.shape[0]

        def step(carry, x_t, w_ih=w_ih, w_hh=w_hh, bias=bias, H=H):
            h, c = carry
            gates = x_t @ w_ih + h @ w_hh + bias
            i = jax.nn.sigmoid(gates[:, 0 * H:1 * H])
            f = jax.nn.sigmoid(gates[:, 1 * H:2 * H])
            g = jnp.tanh(gates[:, 2 * H:3 * H])
            o = jax.nn.sigmoid(gates[:, 3 * H:4 * H])
            c = f * c + i * g
            h = o * jnp.tanh(c)
            return (h, c), h

        init = (jnp.zeros((B, H), jnp.float32), jnp.zeros((B, H), jnp.float32))
        _, ys = lax.scan(step, init, jnp.transpose(x, (1, 0, 2)))
        x = jnp.transpose(ys, (1, 0, 2))
        outs.append(x)
    return jnp.stack(outs, axis=0)


if __name__ == "__main__":
    B, T = 2, 8
    input_size, hidden_size, num_layers = 16, 32, 2

    key = jax.random.PRNGKey(0)
    key, kx = jax.random.split(key)
    x = jax.random.normal(kx, (B, T, input_size), jnp.float32)

    params = init_lstm4graph_params(key, input_size, hidden_size, num_layers)

    out = jax.jit(lstm4graph_forward)(x, params)
    out = jax.block_until_ready(out)

    assert out.shape == (num_layers, B, T, hidden_size), out.shape
    assert out.dtype == jnp.float32

    ref = _lstm_reference(x, params)
    max_err = float(jnp.max(jnp.abs(out - ref)))
    assert max_err < 1e-3, f"max abs err vs reference: {max_err}"

    print("KERNEL_OK")
</pallas_src>

<mosaic_0001>
module attributes {stable_mosaic.version = 11 : i64} {
  func.func @_lstm_recurrence_kernel(%arg0: i32, %arg1: i32, %arg2: memref<8x8x128xf32, #tpu.memory_space<vmem>>, %arg3: memref<32x128xf32, #tpu.memory_space<vmem>>, %arg4: memref<8x8x32xf32, #tpu.memory_space<vmem>>, %arg5: memref<8x32xf32, #tpu.memory_space<vmem>>, %arg6: memref<8x32xf32, #tpu.memory_space<vmem>>) attributes {dimension_semantics = [#tpu.dimension_semantics<parallel>, #tpu.dimension_semantics<arbitrary>], iteration_bounds = array<i64: 1, 1>, scalar_prefetch = 0 : i64, scratch_operands = 2 : i64, tpu.core_type = #tpu.core_type<tc>, window_params = [{transform_indices = @transform_0, window_bounds = array<i64: 8, 8, 128>}, {pipeline_mode = #tpu.pipeline_mode<synchronous>, transform_indices = @transform_1, window_bounds = array<i64: 32, 128>}, {transform_indices = @transform_2, window_bounds = array<i64: 8, 8, 32>}]} {
    %c0_i32 = arith.constant 0 : i32
    %0 = arith.cmpi eq, %arg1, %c0_i32 : i32
    %1 = arith.extui %0 : i1 to i32
    %c0_i32_0 = arith.constant 0 : i32
    %2 = arith.cmpi ne, %1, %c0_i32_0 : i32
    scf.if %2 {
      %cst_82 = arith.constant 0.000000e+00 : f32
      %264 = vector.broadcast %cst_82 : f32 to vector<8x32xf32>
      %c0_83 = arith.constant 0 : index
      %c0_84 = arith.constant 0 : index
      %265 = vector.load %arg5[%c0_83, %c0_84] : memref<8x32xf32, #tpu.memory_space<vmem>>, vector<8x32xf32>
      tpu.vector_store %arg5[%c0_83, %c0_84], %264 {strides = array<i32>} : memref<8x32xf32, #tpu.memory_space<vmem>>, vector<8x32xf32>,
      %cst_85 = arith.constant 0.000000e+00 : f32
      %266 = vector.broadcast %cst_85 : f32 to vector<8x32xf32>
      %c0_86 = arith.constant 0 : index
      %c0_87 = arith.constant 0 : index
      %267 = vector.load %arg6[%c0_86, %c0_87] : memref<8x32xf32, #tpu.memory_space<vmem>>, vector<8x32xf32>
      tpu.vector_store %arg6[%c0_86, %c0_87], %266 {strides = array<i32>} : memref<8x32xf32, #tpu.memory_space<vmem>>, vector<8x32xf32>,
    } else {
    }
    %c0 = arith.constant 0 : index
    %c0_1 = arith.constant 0 : index
    %3 = vector.load %arg3[%c0, %c0_1] : memref<32x128xf32, #tpu.memory_space<vmem>>, vector<32x128xf32>
    %c0_2 = arith.constant 0 : index
    %c0_3 = arith.constant 0 : index
    %4 = vector.load %arg5[%c0_2, %c0_3] : memref<8x32xf32, #tpu.memory_space<vmem>>, vector<8x32xf32>
    %c0_4 = arith.constant 0 : index
    %c0_5 = arith.constant 0 : index
    %5 = vector.load %arg6[%c0_4, %c0_5] : memref<8x32xf32, #tpu.memory_space<vmem>>, vector<8x32xf32>
    %c0_6 = arith.constant 0 : index
    %c0_7 = arith.constant 0 : index
    %c0_8 = arith.constant 0 : index
    %6 = vector.load %arg2[%c0_6, %c0_7, %c0_8] : memref<8x8x128xf32, #tpu.memory_space<vmem>>, vector<1x8x128xf32>
    %7 = vector.shape_cast %6 : vector<1x8x128xf32> to vector<8x128xf32>
    %cst = arith.constant dense<0.000000e+00> : vector<8x128xf32>
    %8 = tpu.matmul %4, %3, %cst {dimension_numbers = #tpu.dot_dimension_numbers<[1], [0], [0], [1], [0, 0, 1, 1], [], []>} : vector<8x32xf32>, vector<32x128xf32>, vector<8x128xf32> -> vector<8x128xf32>
    %9 = arith.addf %7, %8 : vector<8x128xf32>
    %10 = vector.extract_strided_slice %9 {offsets = [0, 0], sizes = [8, 32], strides = [1, 1]} : vector<8x128xf32> to vector<8x32xf32>
    %11 = arith.negf %10 : vector<8x32xf32>
    %12 = math.exp %11 : vector<8x32xf32>
    %cst_9 = arith.constant 1.000000e+00 : f32
    %13 = vector.broadcast %cst_9 : f32 to vector<8x32xf32>
    %14 = arith.addf %13, %12 : vector<8x32xf32>
    %15 = arith.divf %13, %14 : vector<8x32xf32>
    %16 = vector.extract_strided_slice %9 {offsets = [0, 32], sizes = [8, 32], strides = [1, 1]} : vector<8x128xf32> to vector<8x32xf32>
    %17 = arith.negf %16 : vector<8x32xf32>
    %18 = math.exp %17 : vector<8x32xf32>
    %cst_10 = arith.constant 1.000000e+00 : f32
    %19 = vector.broadcast %cst_10 : f32 to vector<8x32xf32>
    %20 = arith.addf %19, %18 : vector<8x32xf32>
    %21 = arith.divf %19, %20 : vector<8x32xf32>
    %22 = vector.extract_strided_slice %9 {offsets = [0, 64], sizes = [8, 32], strides = [1, 1]} : vector<8x128xf32> to vector<8x32xf32>
    %23 = math.tanh %22 : vector<8x32xf32>
    %24 = vector.extract_strided_slice %9 {offsets = [0, 96], sizes = [8, 32], strides = [1, 1]} : vector<8x128xf32> to vector<8x32xf32>
    %25 = arith.negf %24 : vector<8x32xf32>
    %26 = math.exp %25 : vector<8x32xf32>
    %cst_11 = arith.constant 1.000000e+00 : f32
    %27 = vector.broadcast %cst_11 : f32 to vector<8x32xf32>
    %28 = arith.addf %27, %26 : vector<8x32xf32>
    %29 = arith.divf %27, %28 : vector<8x32xf32>
    %30 = arith.mulf %21, %5 : vector<8x32xf32>
    %31 = arith.mulf %15, %23 : vector<8x32xf32>
    %32 = arith.addf %30, %31 : vector<8x32xf32>
    %33 = math.tanh %32 : vector<8x32xf32>
    %34 = arith.mulf %29, %33 : vector<8x32xf32>
    %c0_12 = arith.constant 0 : index
    %c0_13 = arith.constant 0 : index
    %c0_14 = arith.constant 0 : index
    %35 = vector.load %arg4[%c0_12, %c0_13, %c0_14] : memref<8x8x32xf32, #tpu.memory_space<vmem>>, vector<1x8x32xf32>
    %36 = vector.shape_cast %35 : vector<1x8x32xf32> to vector<8x32xf32>
    %37 = vector.shape_cast %34 : vector<8x32xf32> to vector<1x8x32xf32>
    tpu.vector_store %arg4[%c0_12, %c0_13, %c0_14], %37 {strides = array<i32>} : memref<8x8x32xf32, #tpu.memory_space<vmem>>, vector<1x8x32xf32>,
    %c1 = arith.constant 1 : index
    %c0_15 = arith.constant 0 : index
    %c0_16 = arith.constant 0 : index
    %38 = vector.load %arg2[%c1, %c0_15, %c0_16] : memref<8x8x128xf32, #tpu.memory_space<vmem>>, vector<1x8x128xf32>
    %39 = vector.shape_cast %38 : vector<1x8x128xf32> to vector<8x128xf32>
    %cst_17 = arith.constant dense<0.000000e+00> : vector<8x128xf32>
    %40 = tpu.matmul %34, %3, %cst_17 {dimension_numbers = #tpu.dot_dimension_numbers<[1], [0], [0], [1], [0, 0, 1, 1], [], []>} : vector<8x32xf32>, vector<32x128xf32>, vector<8x128xf32> -> vector<8x128xf32>
    %41 = arith.addf %39, %40 : vector<8x128xf32>
    %42 = vector.extract_strided_slice %41 {offsets = [0, 0], sizes = [8, 32], strides = [1, 1]} : vector<8x128xf32> to vector<8x32xf32>
    %43 = arith.negf %42 : vector<8x32xf32>
    %44 = math.exp %43 : vector<8x32xf32>
    %cst_18 = arith.constant 1.000000e+00 : f32
    %45 = vector.broadcast %cst_18 : f32 to vector<8x32xf32>
    %46 = arith.addf %45, %44 : vector<8x32xf32>
    %47 = arith.divf %45, %46 : vector<8x32xf32>
    %48 = vector.extract_strided_slice %41 {offsets = [0, 32], sizes = [8, 32], strides = [1, 1]} : vector<8x128xf32> to vector<8x32xf32>
    %49 = arith.negf %48 : vector<8x32xf32>
    %50 = math.exp %49 : vector<8x32xf32>
    %cst_19 = arith.constant 1.000000e+00 : f32
    %51 = vector.broadcast %cst_19 : f32 to vector<8x32xf32>
    %52 = arith.addf %51, %50 : vector<8x32xf32>
    %53 = arith.divf %51, %52 : vector<8x32xf32>
    %54 = vector.extract_strided_slice %41 {offsets = [0, 64], sizes = [8, 32], strides = [1, 1]} : vector<8x128xf32> to vector<8x32xf32>
    %55 = math.tanh %54 : vector<8x32xf32>
    %56 = vector.extract_strided_slice %41 {offsets = [0, 96], sizes = [8, 32], strides = [1, 1]} : vector<8x128xf32> to vector<8x32xf32>
    %57 = arith.negf %56 : vector<8x32xf32>
    %58 = math.exp %57 : vector<8x32xf32>
    %cst_20 = arith.constant 1.000000e+00 : f32
    %59 = vector.broadcast %cst_20 : f32 to vector<8x32xf32>
    %60 = arith.addf %59, %58 : vector<8x32xf32>
    %61 = arith.divf %59, %60 : vector<8x32xf32>
    %62 = arith.mulf %53, %32 : vector<8x32xf32>
    %63 = arith.mulf %47, %55 : vector<8x32xf32>
    %64 = arith.addf %62, %63 : vector<8x32xf32>
    %65 = math.tanh %64 : vector<8x32xf32>
    %66 = arith.mulf %61, %65 : vector<8x32xf32>
    %c1_21 = arith.constant 1 : index
    %c0_22 = arith.constant 0 : index
    %c0_23 = arith.constant 0 : index
    %67 = vector.load %arg4[%c1_21, %c0_22, %c0_23] : memref<8x8x32xf32, #tpu.memory_space<vmem>>, vector<1x8x32xf32>
    %68 = vector.shape_cast %67 : vector<1x8x32xf32> to vector<8x32xf32>
    %69 = vector.shape_cast %66 : vector<8x32xf32> to vector<1x8x32xf32>
    tpu.vector_store %arg4[%c1_21, %c0_22, %c0_23], %69 {strides = array<i32>} : memref<8x8x32xf32, #tpu.memory_space<vmem>>, vector<1x8x32xf32>,
    %c2 = arith.constant 2 : index
    %c0_24 = arith.constant 0 : index
    %c0_25 = arith.constant 0 : index
    %70 = vector.load %arg2[%c2, %c0_24, %c0_25] : memref<8x8x128xf32, #tpu.memory_space<vmem>>, vector<1x8x128xf32>
    %71 = vector.shape_cast %70 : vector<1x8x128xf32> to vector<8x128xf32>
    %cst_26 = arith.constant dense<0.000000e+00> : vector<8x128xf32>
    %72 = tpu.matmul %66, %3, %cst_26 {dimension_numbers = #tpu.dot_dimension_numbers<[1], [0], [0], [1], [0, 0, 1, 1], [], []>} : vector<8x32xf32>, vector<32x128xf32>, vector<8x128xf32> -> vector<8x128xf32>
    %73 = arith.addf %71, %72 : vector<8x128xf32>
    %74 = vector.extract_strided_slice %73 {offsets = [0, 0], sizes = [8, 32], strides = [1, 1]} : vector<8x128xf32> to vector<8x32xf32>
    %75 = arith.negf %74 : vector<8x32xf32>
    %76 = math.exp %75 : vector<8x32xf32>
    %cst_27 = arith.constant 1.000000e+00 : f32
    %77 = vector.broadcast %cst_27 : f32 to vector<8x32xf32>
    %78 = arith.addf %77, %76 : vector<8x32xf32>
    %79 = arith.divf %77, %78 : vector<8x32xf32>
    %80 = vector.extract_strided_slice %73 {offsets = [0, 32], sizes = [8, 32], strides = [1, 1]} : vector<8x128xf32> to vector<8x32xf32>
    %81 = arith.negf %80 : vector<8x32xf32>
    %82 = math.exp %81 : vector<8x32xf32>
    %cst_28 = arith.constant 1.000000e+00 : f32
    %83 = vector.broadcast %cst_28 : f32 to vector<8x32xf32>
    %84 = arith.addf %83, %82 : vector<8x32xf32>
    %85 = arith.divf %83, %84 : vector<8x32xf32>
    %86 = vector.extract_strided_slice %73 {offsets = [0, 64], sizes = [8, 32], strides = [1, 1]} : vector<8x128xf32> to vector<8x32xf32>
    %87 = math.tanh %86 : vector<8x32xf32>
    %88 = vector.extract_strided_slice %73 {offsets = [0, 96], sizes = [8, 32], strides = [1, 1]} : vector<8x128xf32> to vector<8x32xf32>
    %89 = arith.negf %88 : vector<8x32xf32>
    %90 = math.exp %89 : vector<8x32xf32>
    %cst_29 = arith.constant 1.000000e+00 : f32
    %91 = vector.broadcast %cst_29 : f32 to vector<8x32xf32>
    %92 = arith.addf %91, %90 : vector<8x32xf32>
    %93 = arith.divf %91, %92 : vector<8x32xf32>
    %94 = arith.mulf %85, %64 : vector<8x32xf32>
    %95 = arith.mulf %79, %87 : vector<8x32xf32>
    %96 = arith.addf %94, %95 : vector<8x32xf32>
    %97 = math.tanh %96 : vector<8x32xf32>
    %98 = arith.mulf %93, %97 : vector<8x32xf32>
    %c2_30 = arith.constant 2 : index
    %c0_31 = arith.constant 0 : index
    %c0_32 = arith.constant 0 : index
    %99 = vector.load %arg4[%c2_30, %c0_31, %c0_32] : memref<8x8x32xf32, #tpu.memory_space<vmem>>, vector<1x8x32xf32>
    %100 = vector.shape_cast %99 : vector<1x8x32xf32> to vector<8x32xf32>
    %101 = vector.shape_cast %98 : vector<8x32xf32> to vector<1x8x32xf32>
    tpu.vector_store %arg4[%c2_30, %c0_31, %c0_32], %101 {strides = array<i32>} : memref<8x8x32xf32, #tpu.memory_space<vmem>>, vector<1x8x32xf32>,
    %c3 = arith.constant 3 : index
    %c0_33 = arith.constant 0 : index
    %c0_34 = arith.constant 0 : index
    %102 = vector.load %arg2[%c3, %c0_33, %c0_34] : memref<8x8x128xf32, #tpu.memory_space<vmem>>, vector<1x8x128xf32>
    %103 = vector.shape_cast %102 : vector<1x8x128xf32> to vector<8x128xf32>
    %cst_35 = arith.constant dense<0.000000e+00> : vector<8x128xf32>
    %104 = tpu.matmul %98, %3, %cst_35 {dimension_numbers = #tpu.dot_dimension_numbers<[1], [0], [0], [1], [0, 0, 1, 1], [], []>} : vector<8x32xf32>, vector<32x128xf32>, vector<8x128xf32> -> vector<8x128xf32>
    %105 = arith.addf %103, %104 : vector<8x128xf32>
    %106 = vector.extract_strided_slice %105 {offsets = [0, 0], sizes = [8, 32], strides = [1, 1]} : vector<8x128xf32> to vector<8x32xf32>
    %107 = arith.negf %106 : vector<8x32xf32>
    %108 = math.exp %107 : vector<8x32xf32>
    %cst_36 = arith.constant 1.000000e+00 : f32
    %109 = vector.broadcast %cst_36 : f32 to vector<8x32xf32>
    %110 = arith.addf %109, %108 : vector<8x32xf32>
    %111 = arith.divf %109, %110 : vector<8x32xf32>
    %112 = vector.extract_strided_slice %105 {offsets = [0, 32], sizes = [8, 32], strides = [1, 1]} : vector<8x128xf32> to vector<8x32xf32>
    %113 = arith.negf %112 : vector<8x32xf32>
    %114 = math.exp %113 : vector<8x32xf32>
    %cst_37 = arith.constant 1.000000e+00 : f32
    %115 = vector.broadcast %cst_37 : f32 to vector<8x32xf32>
    %116 = arith.addf %115, %114 : vector<8x32xf32>
    %117 = arith.divf %115, %116 : vector<8x32xf32>
    %118 = vector.extract_strided_slice %105 {offsets = [0, 64], sizes = [8, 32], strides = [1, 1]} : vector<8x128xf32> to vector<8x32xf32>
    %119 = math.tanh %118 : vector<8x32xf32>
    %120 = vector.extract_strided_slice %105 {offsets = [0, 96], sizes = [8, 32], strides = [1, 1]} : vector<8x128xf32> to vector<8x32xf32>
    %121 = arith.negf %120 : vector<8x32xf32>
    %122 = math.exp %121 : vector<8x32xf32>
    %cst_38 = arith.constant 1.000000e+00 : f32
    %123 = vector.broadcast %cst_38 : f32 to vector<8x32xf32>
    %124 = arith.addf %123, %122 : vector<8x32xf32>
    %125 = arith.divf %123, %124 : vector<8x32xf32>
    %126 = arith.mulf %117, %96 : vector<8x32xf32>
    %127 = arith.mulf %111, %119 : vector<8x32xf32>
    %128 = arith.addf %126, %127 : vector<8x32xf32>
    %129 = math.tanh %128 : vector<8x32xf32>
    %130 = arith.mulf %125, %129 : vector<8x32xf32>
    %c3_39 = arith.constant 3 : index
    %c0_40 = arith.constant 0 : index
    %c0_41 = arith.constant 0 : index
    %131 = vector.load %arg4[%c3_39, %c0_40, %c0_41] : memref<8x8x32xf32, #tpu.memory_space<vmem>>, vector<1x8x32xf32>
    %132 = vector.shape_cast %131 : vector<1x8x32xf32> to vector<8x32xf32>
    %133 = vector.shape_cast %130 : vector<8x32xf32> to vector<1x8x32xf32>
    tpu.vector_store %arg4[%c3_39, %c0_40, %c0_41], %133 {strides = array<i32>} : memref<8x8x32xf32, #tpu.memory_space<vmem>>, vector<1x8x32xf32>,
    %c4 = arith.constant 4 : index
    %c0_42 = arith.constant 0 : index
    %c0_43 = arith.constant 0 : index
    %134 = vector.load %arg2[%c4, %c0_42, %c0_43] : memref<8x8x128xf32, #tpu.memory_space<vmem>>, vector<1x8x128xf32>
    %135 = vector.shape_cast %134 : vector<1x8x128xf32> to vector<8x128xf32>
    %cst_44 = arith.constant dense<0.000000e+00> : vector<8x128xf32>
    %136 = tpu.matmul %130, %3, %cst_44 {dimension_numbers = #tpu.dot_dimension_numbers<[1], [0], [0], [1], [0, 0, 1, 1], [], []>} : vector<8x32xf32>, vector<32x128xf32>, vector<8x128xf32> -> vector<8x128xf32>
    %137 = arith.addf %135, %136 : vector<8x128xf32>
    %138 = vector.extract_strided_slice %137 {offsets = [0, 0], sizes = [8, 32], strides = [1, 1]} : vector<8x128xf32> to vector<8x32xf32>
    %139 = arith.negf %138 : vector<8x32xf32>
    %140 = math.exp %139 : vector<8x32xf32>
    %cst_45 = arith.constant 1.000000e+00 : f32
    %141 = vector.broadcast %cst_45 : f32 to vector<8x32xf32>
    %142 = arith.addf %141, %140 : vector<8x32xf32>
    %143 = arith.divf %141, %142 : vector<8x32xf32>
    %144 = vector.extract_strided_slice %137 {offsets = [0, 32], sizes = [8, 32], strides = [1, 1]} : vector<8x128xf32> to vector<8x32xf32>
    %145 = arith.negf %144 : vector<8x32xf32>
    %146 = math.exp %145 : vector<8x32xf32>
    %cst_46 = arith.constant 1.000000e+00 : f32
    %147 = vector.broadcast %cst_46 : f32 to vector<8x32xf32>
    %148 = arith.addf %147, %146 : vector<8x32xf32>
    %149 = arith.divf %147, %148 : vector<8x32xf32>
    %150 = vector.extract_strided_slice %137 {offsets = [0, 64], sizes = [8, 32], strides = [1, 1]} : vector<8x128xf32> to vector<8x32xf32>
    %151 = math.tanh %150 : vector<8x32xf32>
    %152 = vector.extract_strided_slice %137 {offsets = [0, 96], sizes = [8, 32], strides = [1, 1]} : vector<8x128xf32> to vector<8x32xf32>
    %153 = arith.negf %152 : vector<8x32xf32>
    %154 = math.exp %153 : vector<8x32xf32>
    %cst_47 = arith.constant 1.000000e+00 : f32
    %155 = vector.broadcast %cst_47 : f32 to vector<8x32xf32>
    %156 = arith.addf %155, %154 : vector<8x32xf32>
    %157 = arith.divf %155, %156 : vector<8x32xf32>
    %158 = arith.mulf %149, %128 : vector<8x32xf32>
    %159 = arith.mulf %143, %151 : vector<8x32xf32>
    %160 = arith.addf %158, %159 : vector<8x32xf32>
    %161 = math.tanh %160 : vector<8x32xf32>
    %162 = arith.mulf %157, %161 : vector<8x32xf32>
    %c4_48 = arith.constant 4 : index
    %c0_49 = arith.constant 0 : index
    %c0_50 = arith.constant 0 : index
    %163 = vector.load %arg4[%c4_48, %c0_49, %c0_50] : memref<8x8x32xf32, #tpu.memory_space<vmem>>, vector<1x8x32xf32>
    %164 = vector.shape_cast %163 : vector<1x8x32xf32> to vector<8x32xf32>
    %165 = vector.shape_cast %162 : vector<8x32xf32> to vector<1x8x32xf32>
    tpu.vector_store %arg4[%c4_48, %c0_49, %c0_50], %165 {strides = array<i32>} : memref<8x8x32xf32, #tpu.memory_space<vmem>>, vector<1x8x32xf32>,
    %c5 = arith.constant 5 : index
    %c0_51 = arith.constant 0 : index
    %c0_52 = arith.constant 0 : index
    %166 = vector.load %arg2[%c5, %c0_51, %c0_52] : memref<8x8x128xf32, #tpu.memory_space<vmem>>, vector<1x8x128xf32>
    %167 = vector.shape_cast %166 : vector<1x8x128xf32> to vector<8x128xf32>
    %cst_53 = arith.constant dense<0.000000e+00> : vector<8x128xf32>
    %168 = tpu.matmul %162, %3, %cst_53 {dimension_numbers = #tpu.dot_dimension_numbers<[1], [0], [0], [1], [0, 0, 1, 1], [], []>} : vector<8x32xf32>, vector<32x128xf32>, vector<8x128xf32> -> vector<8x128xf32>
    %169 = arith.addf %167, %168 : vector<8x128xf32>
    %170 = vector.extract_strided_slice %169 {offsets = [0, 0], sizes = [8, 32], strides = [1, 1]} : vector<8x128xf32> to vector<8x32xf32>
    %171 = arith.negf %170 : vector<8x32xf32>
    %172 = math.exp %171 : vector<8x32xf32>
    %cst_54 = arith.constant 1.000000e+00 : f32
    %173 = vector.broadcast %cst_54 : f32 to vector<8x32xf32>
    %174 = arith.addf %173, %172 : vector<8x32xf32>
    %175 = arith.divf %173, %174 : vector<8x32xf32>
    %176 = vector.extract_strided_slice %169 {offsets = [0, 32], sizes = [8, 32], strides = [1, 1]} : vector<8x128xf32> to vector<8x32xf32>
    %177 = arith.negf %176 : vector<8x32xf32>
    %178 = math.exp %177 : vector<8x32xf32>
    %cst_55 = arith.constant 1.000000e+00 : f32
    %179 = vector.broadcast %cst_55 : f32 to vector<8x32xf32>
    %180 = arith.addf %179, %178 : vector<8x32xf32>
    %181 = arith.divf %179, %180 : vector<8x32xf32>
    %182 = vector.extract_strided_slice %169 {offsets = [0, 64], sizes = [8, 32], strides = [1, 1]} : vector<8x128xf32> to vector<8x32xf32>
    %183 = math.tanh %182 : vector<8x32xf32>
    %184 = vector.extract_strided_slice %169 {offsets = [0, 96], sizes = [8, 32], strides = [1, 1]} : vector<8x128xf32> to vector<8x32xf32>
    %185 = arith.negf %184 : vector<8x32xf32>
    %186 = math.exp %185 : vector<8x32xf32>
    %cst_56 = arith.constant 1.000000e+00 : f32
    %187 = vector.broadcast %cst_56 : f32 to vector<8x32xf32>
    %188 = arith.addf %187, %186 : vector<8x32xf32>
    %189 = arith.divf %187, %188 : vector<8x32xf32>
    %190 = arith.mulf %181, %160 : vector<8x32xf32>
    %191 = arith.mulf %175, %183 : vector<8x32xf32>
    %192 = arith.addf %190, %191 : vector<8x32xf32>
    %193 = math.tanh %192 : vector<8x32xf32>
    %194 = arith.mulf %189, %193 : vector<8x32xf32>
    %c5_57 = arith.constant 5 : index
    %c0_58 = arith.constant 0 : index
    %c0_59 = arith.constant 0 : index
    %195 = vector.load %arg4[%c5_57, %c0_58, %c0_59] : memref<8x8x32xf32, #tpu.memory_space<vmem>>, vector<1x8x32xf32>
    %196 = vector.shape_cast %195 : vector<1x8x32xf32> to vector<8x32xf32>
    %197 = vector.shape_cast %194 : vector<8x32xf32> to vector<1x8x32xf32>
    tpu.vector_store %arg4[%c5_57, %c0_58, %c0_59], %197 {strides = array<i32>} : memref<8x8x32xf32, #tpu.memory_space<vmem>>, vector<1x8x32xf32>,
    %c6 = arith.constant 6 : index
    %c0_60 = arith.constant 0 : index
    %c0_61 = arith.constant 0 : index
    %198 = vector.load %arg2[%c6, %c0_60, %c0_61] : memref<8x8x128xf32, #tpu.memory_space<vmem>>, vector<1x8x128xf32>
    %199 = vector.shape_cast %198 : vector<1x8x128xf32> to vector<8x128xf32>
    %cst_62 = arith.constant dense<0.000000e+00> : vector<8x128xf32>
    %200 = tpu.matmul %194, %3, %cst_62 {dimension_numbers = #tpu.dot_dimension_numbers<[1], [0], [0], [1], [0, 0, 1, 1], [], []>} : vector<8x32xf32>, vector<32x128xf32>, vector<8x128xf32> -> vector<8x128xf32>
    %201 = arith.addf %199, %200 : vector<8x128xf32>
    %202 = vector.extract_strided_slice %201 {offsets = [0, 0], sizes = [8, 32], strides = [1, 1]} : vector<8x128xf32> to vector<8x32xf32>
    %203 = arith.negf %202 : vector<8x32xf32>
    %204 = math.exp %203 : vector<8x32xf32>
    %cst_63 = arith.constant 1.000000e+00 : f32
    %205 = vector.broadcast %cst_63 : f32 to vector<8x32xf32>
    %206 = arith.addf %205, %204 : vector<8x32xf32>
    %207 = arith.divf %205, %206 : vector<8x32xf32>
    %208 = vector.extract_strided_slice %201 {offsets = [0, 32], sizes = [8, 32], strides = [1, 1]} : vector<8x128xf32> to vector<8x32xf32>
    %209 = arith.negf %208 : vector<8x32xf32>
    %210 = math.exp %209 : vector<8x32xf32>
    %cst_64 = arith.constant 1.000000e+00 : f32
    %211 = vector.broadcast %cst_64 : f32 to vector<8x32xf32>
    %212 = arith.addf %211, %210 : vector<8x32xf32>
    %213 = arith.divf %211, %212 : vector<8x32xf32>
    %214 = vector.extract_strided_slice %201 {offsets = [0, 64], sizes = [8, 32], strides = [1, 1]} : vector<8x128xf32> to vector<8x32xf32>
    %215 = math.tanh %214 : vector<8x32xf32>
    %216 = vector.extract_strided_slice %201 {offsets = [0, 96], sizes = [8, 32], strides = [1, 1]} : vector<8x128xf32> to vector<8x32xf32>
    %217 = arith.negf %216 : vector<8x32xf32>
    %218 = math.exp %217 : vector<8x32xf32>
    %cst_65 = arith.constant 1.000000e+00 : f32
    %219 = vector.broadcast %cst_65 : f32 to vector<8x32xf32>
    %220 = arith.addf %219, %218 : vector<8x32xf32>
    %221 = arith.divf %219, %220 : vector<8x32xf32>
    %222 = arith.mulf %213, %192 : vector<8x32xf32>
    %223 = arith.mulf %207, %215 : vector<8x32xf32>
    %224 = arith.addf %222, %223 : vector<8x32xf32>
    %225 = math.tanh %224 : vector<8x32xf32>
    %226 = arith.mulf %221, %225 : vector<8x32xf32>
    %c6_66 = arith.constant 6 : index
    %c0_67 = arith.constant 0 : index
    %c0_68 = arith.constant 0 : index
    %227 = vector.load %arg4[%c6_66, %c0_67, %c0_68] : memref<8x8x32xf32, #tpu.memory_space<vmem>>, vector<1x8x32xf32>
    %228 = vector.shape_cast %227 : vector<1x8x32xf32> to vector<8x32xf32>
    %229 = vector.shape_cast %226 : vector<8x32xf32> to vector<1x8x32xf32>
    tpu.vector_store %arg4[%c6_66, %c0_67, %c0_68], %229 {strides = array<i32>} : memref<8x8x32xf32, #tpu.memory_space<vmem>>, vector<1x8x32xf32>,
    %c7 = arith.constant 7 : index
    %c0_69 = arith.constant 0 : index
    %c0_70 = arith.constant 0 : index
    %230 = vector.load %arg2[%c7, %c0_69, %c0_70] : memref<8x8x128xf32, #tpu.memory_space<vmem>>, vector<1x8x128xf32>
    %231 = vector.shape_cast %230 : vector<1x8x128xf32> to vector<8x128xf32>
    %cst_71 = arith.constant dense<0.000000e+00> : vector<8x128xf32>
    %232 = tpu.matmul %226, %3, %cst_71 {dimension_numbers = #tpu.dot_dimension_numbers<[1], [0], [0], [1], [0, 0, 1, 1], [], []>} : vector<8x32xf32>, vector<32x128xf32>, vector<8x128xf32> -> vector<8x128xf32>
    %233 = arith.addf %231, %232 : vector<8x128xf32>
    %234 = vector.extract_strided_slice %233 {offsets = [0, 0], sizes = [8, 32], strides = [1, 1]} : vector<8x128xf32> to vector<8x32xf32>
    %235 = arith.negf %234 : vector<8x32xf32>
    %236 = math.exp %235 : vector<8x32xf32>
    %cst_72 = arith.constant 1.000000e+00 : f32
    %237 = vector.broadcast %cst_72 : f32 to vector<8x32xf32>
    %238 = arith.addf %237, %236 : vector<8x32xf32>
    %239 = arith.divf %237, %238 : vector<8x32xf32>
    %240 = vector.extract_strided_slice %233 {offsets = [0, 32], sizes = [8, 32], strides = [1, 1]} : vector<8x128xf32> to vector<8x32xf32>
    %241 = arith.negf %240 : vector<8x32xf32>
    %242 = math.exp %241 : vector<8x32xf32>
    %cst_73 = arith.constant 1.000000e+00 : f32
    %243 = vector.broadcast %cst_73 : f32 to vector<8x32xf32>
    %244 = arith.addf %243, %242 : vector<8x32xf32>
    %245 = arith.divf %243, %244 : vector<8x32xf32>
    %246 = vector.extract_strided_slice %233 {offsets = [0, 64], sizes = [8, 32], strides = [1, 1]} : vector<8x128xf32> to vector<8x32xf32>
    %247 = math.tanh %246 : vector<8x32xf32>
    %248 = vector.extract_strided_slice %233 {offsets = [0, 96], sizes = [8, 32], strides = [1, 1]} : vector<8x128xf32> to vector<8x32xf32>
    %249 = arith.negf %248 : vector<8x32xf32>
    %250 = math.exp %249 : vector<8x32xf32>
    %cst_74 = arith.constant 1.000000e+00 : f32
    %251 = vector.broadcast %cst_74 : f32 to vector<8x32xf32>
    %252 = arith.addf %251, %250 : vector<8x32xf32>
    %253 = arith.divf %251, %252 : vector<8x32xf32>
    %254 = arith.mulf %245, %224 : vector<8x32xf32>
    %255 = arith.mulf %239, %247 : vector<8x32xf32>
    %256 = arith.addf %254, %255 : vector<8x32xf32>
    %257 = math.tanh %256 : vector<8x32xf32>
    %258 = arith.mulf %253, %257 : vector<8x32xf32>
    %c7_75 = arith.constant 7 : index
    %c0_76 = arith.constant 0 : index
    %c0_77 = arith.constant 0 : index
    %259 = vector.load %arg4[%c7_75, %c0_76, %c0_77] : memref<8x8x32xf32, #tpu.memory_space<vmem>>, vector<1x8x32xf32>
    %260 = vector.shape_cast %259 : vector<1x8x32xf32> to vector<8x32xf32>
    %261 = vector.shape_cast %258 : vector<8x32xf32> to vector<1x8x32xf32>
    tpu.vector_store %arg4[%c7_75, %c0_76, %c0_77], %261 {strides = array<i32>} : memref<8x8x32xf32, #tpu.memory_space<vmem>>, vector<1x8x32xf32>,
    %c0_78 = arith.constant 0 : index
    %c0_79 = arith.constant 0 : index
    %262 = vector.load %arg5[%c0_78, %c0_79] : memref<8x32xf32, #tpu.memory_space<vmem>>, vector<8x32xf32>
    tpu.vector_store %arg5[%c0_78, %c0_79], %258 {strides = array<i32>} : memref<8x32xf32, #tpu.memory_space<vmem>>, vector<8x32xf32>,
    %c0_80 = arith.constant 0 : index
    %c0_81 = arith.constant 0 : index
    %263 = vector.load %arg6[%c0_80, %c0_81] : memref<8x32xf32, #tpu.memory_space<vmem>>, vector<8x32xf32>
    tpu.vector_store %arg6[%c0_80, %c0_81], %256 {strides = array<i32>} : memref<8x32xf32, #tpu.memory_space<vmem>>, vector<8x32xf32>,
    return
  }
  func.func @transform_0(%arg0: i32, %arg1: i32) -> (i32, i32, i32) {
    %c0_i32 = arith.constant 0 : i32
    %c0_i32_0 = arith.constant 0 : i32
    return %arg1, %arg0, %c0_i32 : i32, i32, i32
  }
  func.func @transform_1(%arg0: i32, %arg1: i32) -> (i32, i32) {
    %c0_i32 = arith.constant 0 : i32
    %c0_i32_0 = arith.constant 0 : i32
    %c0_i32_1 = arith.constant 0 : i32
    return %c0_i32, %c0_i32_0 : i32, i32
  }
  func.func @transform_2(%arg0: i32, %arg1: i32) -> (i32, i32, i32) {
    %c0_i32 = arith.constant 0 : i32
    %c0_i32_0 = arith.constant 0 : i32
    return %arg1, %arg0, %c0_i32 : i32, i32, i32
  }
}

</mosaic_0001>

<llo_original>
// kernel: lstm4graph_forward.2
$region0: #{lstm4graph_forward.2}
  #allocation0 [shape = 'u32[]', space=smem, size = 0x4, offset = 0x4, fixed_abs, tag = 'smem constant byte address 0x4 - core index']
  #allocation1 [shape = 'u32[144,128]{1,0:T(1,128)}', space=vmem, size = 0x12000, scoped, tag = 'internal scratch']
  #allocation2 [shape = 'f32[8,32]{1,0:T(8,128)}', space=vmem, size = 0x1000, scoped, tag = 'scratch operand']
  #allocation3 [shape = 'f32[8,32]{1,0:T(8,128)}', space=vmem, size = 0x1000, scoped, tag = 'scratch operand']
  %s0 = inlined_call_operand.vmem [shape: f32[8,8,128], index: 0, kind: input, shape index: {}]
  %s1 = inlined_call_operand.vmem [shape: f32[32,128], index: 1, kind: input, shape index: {}]
  %s2 = inlined_call_operand.vmem [shape: f32[8,8,32], index: 2, kind: output, shape index: {}]
  %s3 = sld [smem:[#allocation0]]
  $region22: #{lstm4graph_forward.2} parent=0
    _
  %s5 = ssub.s32 1, %s3
  %s6 = scalar_select 0, %s5, %s3
  // Predicated region
  $region2: #{lstm4graph_forward.2} parent=0 // pred_check
    _
  $region3: #{lstm4graph_forward.2} parent=0 // pred_check_branch
    %8 = sbr.rel (0) target = $region5
  $region4: #{lstm4graph_forward.2} parent=0 // pred_region
    _
  $region5: #{lstm4graph_forward.2} parent=0 // pred_fallthru
    _
  // Predicated region
  $region6: #{lstm4graph_forward.2} parent=0 // pred_check
    _
  $region7: #{lstm4graph_forward.2} parent=0 // pred_check_branch
    %10 = sbr.rel (0) target = $region9
  $region8: #{lstm4graph_forward.2} parent=0 // pred_region
    _
  $region9: #{lstm4graph_forward.2} parent=0 // pred_fallthru
    _
  %p11 = scmp.eq.s32.totalorder 0, 0
  // Predicated region
  $region10: #{lstm4graph_forward.2} parent=0 // pred_check
    %p12 = pneg %p11
  $region11: #{lstm4graph_forward.2} parent=0 // pred_check_branch
    %14 = sbr.rel (%p12) target = $region13
  $region12: #{lstm4graph_forward.2} parent=0 // pred_region
    %vm15 = vcmask 261120
    %16 = vst.msk [vmem:[#allocation2] sm:$0xff] %vm15, 0.0
    %17 = vst.msk [vmem:[#allocation3] sm:$0xff] %vm15, 0.0
  $region13: #{lstm4graph_forward.2} parent=0 // pred_fallthru
    _
  %v18 = vld [vmem:[%s1] sm:$0xff]
  %v19 = vld [vmem:[%s1 + $0x8] sm:$0xff]
  %v20 = vld [vmem:[%s1 + $0x10] sm:$0xff]
  %v21 = vld [vmem:[%s1 + $0x18] sm:$0xff]
  %v22 = vld [vmem:[#allocation2] sm:$0xff]
  %v23 = vld [vmem:[#allocation3] sm:$0xff]
  %v24 = vld [vmem:[%s0] sm:$0xff]
  %vm25 = vcmask 261120
  %v27 = vsel %vm25, %v22, 0
  %29 = vmatprep.subr.mxu0 0.0
  %30 = vmatpush1.msra.mxu0 %v18
  %31 = vmatprep.subr.mxu0 0.0
  %32 = vmatpush1.msra.mxu0 %v19
  %33 = vmatprep.subr.mxu0 0.0
  %34 = vmatpush1.msra.mxu0 %v20
  %35 = vmatprep.subr.mxu0 0.0
  %36 = vmatpush1.msra.mxu0 %v21
  %37 = vmatprep.subr.mxu0 0.0
  %38 = vmatpush1.msra.mxu0 0.0
  %39 = vmatprep.subr.mxu0 0.0
  %40 = vmatpush1.msra.mxu0 0.0
  %41 = vmatprep.subr.mxu0 0.0
  %42 = vmatpush1.msra.mxu0 0.0
  %43 = vmatprep.subr.mxu0 0.0
  %44 = vmatpush1.msra.mxu0 0.0
  %45 = vmatprep.subr.mxu0 0.0
  %46 = vmatpush1.msra.mxu0 0.0
  %47 = vmatprep.subr.mxu0 0.0
  %48 = vmatpush1.msra.mxu0 0.0
  %49 = vmatprep.subr.mxu0 0.0
  %50 = vmatpush1.msra.mxu0 0.0
  %51 = vmatprep.subr.mxu0 0.0
  %52 = vmatpush1.msra.mxu0 0.0
  %53 = vmatprep.subr.mxu0 0.0
  %54 = vmatpush1.msra.mxu0 0.0
  %55 = vmatprep.subr.mxu0 0.0
  %56 = vmatpush1.msra.mxu0 0.0
  %57 = vmatprep.subr.mxu0 0.0
  %58 = vmatpush1.msra.mxu0 0.0
  %59 = vmatprep.subr.mxu0 0.0
  %60 = vmatpush1.msra.mxu0 0.0
  %61 = vmatprep.subr.mxu0 0.0
  %62 = vmatpush1.msra.mxu0 0.0
  %63 = vmatprep.subr.mxu0 0.0
  %64 = vmatpush1.msra.mxu0 0.0
  %65 = vmatprep.subr.mxu0 0.0
  %66 = vmatpush1.msra.mxu0 0.0
  %67 = vmatprep.subr.mxu0 0.0
  %68 = vmatpush1.msra.mxu0 0.0
  %69 = vmatprep.subr.mxu0 0.0
  %70 = vmatpush1.msra.mxu0 0.0
  %71 = vmatprep.subr.mxu0 0.0
  %72 = vmatpush1.msra.mxu0 0.0
  %73 = vmatprep.subr.mxu0 0.0
  %74 = vmatpush1.msra.mxu0 0.0
  %75 = vmatprep.subr.mxu0 0.0
  %76 = vmatpush1.msra.mxu0 0.0
  %77 = vmatprep.subr.mxu0 0.0
  %78 = vmatpush1.msra.mxu0 0.0
  %79 = vmatprep.subr.mxu0 0.0
  %80 = vmatpush1.msra.mxu0 0.0
  %81 = vmatprep.subr.mxu0 0.0
  %82 = vmatpush1.msra.mxu0 0.0
  %83 = vmatprep.subr.mxu0 0.0
  %84 = vmatpush1.msra.mxu0 0.0
  %85 = vmatprep.subr.mxu0 0.0
  %86 = vmatpush1.msra.mxu0 0.0
  %87 = vmatprep.subr.mxu0 0.0
  %88 = vmatpush1.msra.mxu0 0.0
  %89 = vmatprep.subr.mxu0 0.0
  %90 = vmatpush1.msra.mxu0 0.0
  %91 = vmatprep.subr.mxu0 0.0
  %92 = vmatpush1.msra.mxu0 0.0
  %93 = vmatprep.mubr.f32.mxu0 0.0
  %94 = vmatmul.mubr.f32.gmra.mrb[0].mxu0 %v27
  %v95 = vpop.f32.mrb[0].mxu0
  %v96 = vadd.f32 0.0, %v95
  %v97 = vpop.f32.mrb[0].mxu0
  %98 = vdwg.mxu0
  %v99 = vadd.f32 %v24, %v96
  %v100 = vxor.u32 %v99, 2147483648
  %v101 = vmul.f32 %v100, 1.442695
  %v102 = vpow.pop %v101
  %v103 = vadd.f32 %v102, 1.0
  %v104 = vrcp.pop %v103
  %v105 = vmul.f32 1.0, %v104
  %v106 = vtanh.pop %v99
  %108 = vrot.lane.b32.xlu0 %v23, 32
  %v109 = vpop.permute.xlu0 %108
  %v111 = vmul.f32 %v105, %v109
  %113 = vrot.lane.b32.xlu0 %v106, 64
  %v114 = vpop.permute.xlu0 %113
  %v116 = vmul.f32 %v105, %v114
  %118 = vrot.lane.b32.xlu0 %v116, 32
  %v119 = vpop.permute.xlu0 %118
  %v121 = vadd.f32 %v111, %v119
  %v122 = vtanh.pop %v121
  %124 = vrot.lane.b32.xlu0 %v122, 64
  %v125 = vpop.permute.xlu0 %124
  %v127 = vmul.f32 %v105, %v125
  %129 = vrot.lane.b32.xlu0 %v127, 32
  %v130 = vpop.permute.xlu0 %129
  %132 = vst.msk [vmem:[%s2] sm:$0xff] %vm25, %v130
  %s133 = scalar_lea.vmem %s0, 8
  %v134 = vld [vmem:[%s133] sm:$0xff]
  %v135 = vsel %vm25, %v130, 0
  %137 = vmatprep.subr.mxu0 0.0
  %138 = vmatpush1.msra.mxu0 %v18
  %139 = vmatprep.subr.mxu0 0.0
  %140 = vmatpush1.msra.mxu0 %v19
  %141 = vmatprep.subr.mxu0 0.0
  %142 = vmatpush1.msra.mxu0 %v20
  %143 = vmatprep.subr.mxu0 0.0
  %144 = vmatpush1.msra.mxu0 %v21
  %145 = vmatprep.subr.mxu0 0.0
  %146 = vmatpush1.msra.mxu0 0.0
  %147 = vmatprep.subr.mxu0 0.0
  %148 = vmatpush1.msra.mxu0 0.0
  %149 = vmatprep.subr.mxu0 0.0
  %150 = vmatpush1.msra.mxu0 0.0
  %151 = vmatprep.subr.mxu0 0.0
  %152 = vmatpush1.msra.mxu0 0.0
  %153 = vmatprep.subr.mxu0 0.0
  %154 = vmatpush1.msra.mxu0 0.0
  %155 = vmatprep.subr.mxu0 0.0
  %156 = vmatpush1.msra.mxu0 0.0
  %157 = vmatprep.subr.mxu0 0.0
  %158 = vmatpush1.msra.mxu0 0.0
  %159 = vmatprep.subr.mxu0 0.0
  %160 = vmatpush1.msra.mxu0 0.0
  %161 = vmatprep.subr.mxu0 0.0
  %162 = vmatpush1.msra.mxu0 0.0
  %163 = vmatprep.subr.mxu0 0.0
  %164 = vmatpush1.msra.mxu0 0.0
  %165 = vmatprep.subr.mxu0 0.0
  %166 = vmatpush1.msra.mxu0 0.0
  %167 = vmatprep.subr.mxu0 0.0
  %168 = vmatpush1.msra.mxu0 0.0
  %169 = vmatprep.subr.mxu0 0.0
  %170 = vmatpush1.msra.mxu0 0.0
  %171 = vmatprep.subr.mxu0 0.0
  %172 = vmatpush1.msra.mxu0 0.0
  %173 = vmatprep.subr.mxu0 0.0
  %174 = vmatpush1.msra.mxu0 0.0
  %175 = vmatprep.subr.mxu0 0.0
  %176 = vmatpush1.msra.mxu0 0.0
  %177 = vmatprep.subr.mxu0 0.0
  %178 = vmatpush1.msra.mxu0 0.0
  %179 = vmatprep.subr.mxu0 0.0
  %180 = vmatpush1.msra.mxu0 0.0
  %181 = vmatprep.subr.mxu0 0.0
  %182 = vmatpush1.msra.mxu0 0.0
  %183 = vmatprep.subr.mxu0 0.0
  %184 = vmatpush1.msra.mxu0 0.0
  %185 = vmatprep.subr.mxu0 0.0
  %186 = vmatpush1.msra.mxu0 0.0
  %187 = vmatprep.subr.mxu0 0.0
  %188 = vmatpush1.msra.mxu0 0.0
  %189 = vmatprep.subr.mxu0 0.0
  %190 = vmatpush1.msra.mxu0 0.0
  %191 = vmatprep.subr.mxu0 0.0
  %192 = vmatpush1.msra.mxu0 0.0
  %193 = vmatprep.subr.mxu0 0.0
  %194 = vmatpush1.msra.mxu0 0.0
  %195 = vmatprep.subr.mxu0 0.0
  %196 = vmatpush1.msra.mxu0 0.0
  %197 = vmatprep.subr.mxu0 0.0
  %198 = vmatpush1.msra.mxu0 0.0
  %199 = vmatprep.subr.mxu0 0.0
  %200 = vmatpush1.msra.mxu0 0.0
  %201 = vmatprep.mubr.f32.mxu0 0.0
  %202 = vmatmul.mubr.f32.gmra.mrb[0].mxu0 %v135
  %v203 = vpop.f32.mrb[0].mxu0
  %v204 = vadd.f32 0.0, %v203
  %v205 = vpop.f32.mrb[0].mxu0
  %206 = vdwg.mxu0
  %v207 = vadd.f32 %v134, %v204
  %v208 = vxor.u32 %v207, 2147483648
  %v209 = vmul.f32 %v208, 1.442695
  %v210 = vpow.pop %v209
  %v211 = vadd.f32 %v210, 1.0
  %v212 = vrcp.pop %v211
  %v213 = vmul.f32 1.0, %v212
  %v214 = vtanh.pop %v207
  %v215 = vmul.f32 %v213, %v121
  %217 = vrot.lane.b32.xlu0 %v214, 64
  %v218 = vpop.permute.xlu0 %217
  %v220 = vmul.f32 %v213, %v218
  %222 = vrot.lane.b32.xlu0 %v220, 32
  %v223 = vpop.permute.xlu0 %222
  %v225 = vadd.f32 %v215, %v223
  %v226 = vtanh.pop %v225
  %228 = vrot.lane.b32.xlu0 %v226, 64
  %v229 = vpop.permute.xlu0 %228
  %v231 = vmul.f32 %v213, %v229
  %233 = vrot.lane.b32.xlu0 %v231, 32
  %v234 = vpop.permute.xlu0 %233
  %s236 = scalar_lea.vmem %s2, 8
  %237 = vst.msk [vmem:[%s236] sm:$0xff] %vm25, %v234
  %s238 = scalar_lea.vmem %s0, 16
  %v239 = vld [vmem:[%s238] sm:$0xff]
  %v240 = vsel %vm25, %v234, 0
  %242 = vmatprep.subr.mxu0 0.0
  %243 = vmatpush1.msra.mxu0 %v18
  %244 = vmatprep.subr.mxu0 0.0
  %245 = vmatpush1.msra.mxu0 %v19
  %246 = vmatprep.subr.mxu0 0.0
  %247 = vmatpush1.msra.mxu0 %v20
  %248 = vmatprep.subr.mxu0 0.0
  %249 = vmatpush1.msra.mxu0 %v21
  %250 = vmatprep.subr.mxu0 0.0
  %251 = vmatpush1.msra.mxu0 0.0
  %252 = vmatprep.subr.mxu0 0.0
  %253 = vmatpush1.msra.mxu0 0.0
  %254 = vmatprep.subr.mxu0 0.0
  %255 = vmatpush1.msra.mxu0 0.0
  %256 = vmatprep.subr.mxu0 0.0
  %257 = vmatpush1.msra.mxu0 0.0
  %258 = vmatprep.subr.mxu0 0.0
  %259 = vmatpush1.msra.mxu0 0.0
  %260 = vmatprep.subr.mxu0 0.0
  %261 = vmatpush1.msra.mxu0 0.0
  %262 = vmatprep.subr.mxu0 0.0
  %263 = vmatpush1.msra.mxu0 0.0
  %264 = vmatprep.subr.mxu0 0.0
  %265 = vmatpush1.msra.mxu0 0.0
  %266 = vmatprep.subr.mxu0 0.0
  %267 = vmatpush1.msra.mxu0 0.0
  %268 = vmatprep.subr.mxu0 0.0
  %269 = vmatpush1.msra.mxu0 0.0
  %270 = vmatprep.subr.mxu0 0.0
  %271 = vmatpush1.msra.mxu0 0.0
  %272 = vmatprep.subr.mxu0 0.0
  %273 = vmatpush1.msra.mxu0 0.0
  %274 = vmatprep.subr.mxu0 0.0
  %275 = vmatpush1.msra.mxu0 0.0
  %276 = vmatprep.subr.mxu0 0.0
  %277 = vmatpush1.msra.mxu0 0.0
  %278 = vmatprep.subr.mxu0 0.0
  %279 = vmatpush1.msra.mxu0 0.0
  %280 = vmatprep.subr.mxu0 0.0
  %281 = vmatpush1.msra.mxu0 0.0
  %282 = vmatprep.subr.mxu0 0.0
  %283 = vmatpush1.msra.mxu0 0.0
  %284 = vmatprep.subr.mxu0 0.0
  %285 = vmatpush1.msra.mxu0 0.0
  %286 = vmatprep.subr.mxu0 0.0
  %287 = vmatpush1.msra.mxu0 0.0
  %288 = vmatprep.subr.mxu0 0.0
  %289 = vmatpush1.msra.mxu0 0.0
  %290 = vmatprep.subr.mxu0 0.0
  %291 = vmatpush1.msra.mxu0 0.0
  %292 = vmatprep.subr.mxu0 0.0
  %293 = vmatpush1.msra.mxu0 0.0
  %294 = vmatprep.subr.mxu0 0.0
  %295 = vmatpush1.msra.mxu0 0.0
  %296 = vmatprep.subr.mxu0 0.0
  %297 = vmatpush1.msra.mxu0 0.0
  %298 = vmatprep.subr.mxu0 0.0
  %299 = vmatpush1.msra.mxu0 0.0
  %300 = vmatprep.subr.mxu0 0.0
  %301 = vmatpush1.msra.mxu0 0.0
  %302 = vmatprep.subr.mxu0 0.0
  %303 = vmatpush1.msra.mxu0 0.0
  %304 = vmatprep.subr.mxu0 0.0
  %305 = vmatpush1.msra.mxu0 0.0
  %306 = vmatprep.mubr.f32.mxu0 0.0
  %307 = vmatmul.mubr.f32.gmra.mrb[0].mxu0 %v240
  %v308 = vpop.f32.mrb[0].mxu0
  %v309 = vadd.f32 0.0, %v308
  %v310 = vpop.f32.mrb[0].mxu0
  %311 = vdwg.mxu0
  %v312 = vadd.f32 %v239, %v309
  %v313 = vxor.u32 %v312, 2147483648
  %v314 = vmul.f32 %v313, 1.442695
  %v315 = vpow.pop %v314
  %v316 = vadd.f32 %v315, 1.0
  %v317 = vrcp.pop %v316
  %v318 = vmul.f32 1.0, %v317
  %v319 = vtanh.pop %v312
  %v320 = vmul.f32 %v318, %v225
  %322 = vrot.lane.b32.xlu0 %v319, 64
  %v323 = vpop.permute.xlu0 %322
  %v325 = vmul.f32 %v318, %v323
  %327 = vrot.lane.b32.xlu0 %v325, 32
  %v328 = vpop.permute.xlu0 %327
  %v330 = vadd.f32 %v320, %v328
  %v331 = vtanh.pop %v330
  %333 = vrot.lane.b32.xlu0 %v331, 64
  %v334 = vpop.permute.xlu0 %333
  %v336 = vmul.f32 %v318, %v334
  %338 = vrot.lane.b32.xlu0 %v336, 32
  %v339 = vpop.permute.xlu0 %338
  %s341 = scalar_lea.vmem %s2, 16
  %342 = vst.msk [vmem:[%s341] sm:$0xff] %vm25, %v339
  %s343 = scalar_lea.vmem %s0, 24
  %v344 = vld [vmem:[%s343] sm:$0xff]
  %v345 = vsel %vm25, %v339, 0
  %347 = vmatprep.subr.mxu0 0.0
  %348 = vmatpush1.msra.mxu0 %v18
  %349 = vmatprep.subr.mxu0 0.0
  %350 = vmatpush1.msra.mxu0 %v19
  %351 = vmatprep.subr.mxu0 0.0
  %352 = vmatpush1.msra.mxu0 %v20
  %353 = vmatprep.subr.mxu0 0.0
  %354 = vmatpush1.msra.mxu0 %v21
  %355 = vmatprep.subr.mxu0 0.0
  %356 = vmatpush1.msra.mxu0 0.0
  %357 = vmatprep.subr.mxu0 0.0
  %358 = vmatpush1.msra.mxu0 0.0
  %359 = vmatprep.subr.mxu0 0.0
  %360 = vmatpush1.msra.mxu0 0.0
  %361 = vmatprep.subr.mxu0 0.0
  %362 = vmatpush1.msra.mxu0 0.0
  %363 = vmatprep.subr.mxu0 0.0
  %364 = vmatpush1.msra.mxu0 0.0
  %365 = vmatprep.subr.mxu0 0.0
  %366 = vmatpush1.msra.mxu0 0.0
  %367 = vmatprep.subr.mxu0 0.0
  %368 = vmatpush1.msra.mxu0 0.0
  %369 = vmatprep.subr.mxu0 0.0
  %370 = vmatpush1.msra.mxu0 0.0
  %371 = vmatprep.subr.mxu0 0.0
  %372 = vmatpush1.msra.mxu0 0.0
  %373 = vmatprep.subr.mxu0 0.0
  %374 = vmatpush1.msra.mxu0 0.0
  %375 = vmatprep.subr.mxu0 0.0
  %376 = vmatpush1.msra.mxu0 0.0
  %377 = vmatprep.subr.mxu0 0.0
  %378 = vmatpush1.msra.mxu0 0.0
  %379 = vmatprep.subr.mxu0 0.0
  %380 = vmatpush1.msra.mxu0 0.0
  %381 = vmatprep.subr.mxu0 0.0
  %382 = vmatpush1.msra.mxu0 0.0
  %383 = vmatprep.subr.mxu0 0.0
  %384 = vmatpush1.msra.mxu0 0.0
  %385 = vmatprep.subr.mxu0 0.0
  %386 = vmatpush1.msra.mxu0 0.0
  %387 = vmatprep.subr.mxu0 0.0
  %388 = vmatpush1.msra.mxu0 0.0
  %389 = vmatprep.subr.mxu0 0.0
  %390 = vmatpush1.msra.mxu0 0.0
  %391 = vmatprep.subr.mxu0 0.0
  %392 = vmatpush1.msra.mxu0 0.0
  %393 = vmatprep.subr.mxu0 0.0
  %394 = vmatpush1.msra.mxu0 0.0
  %395 = vmatprep.subr.mxu0 0.0
  %396 = vmatpush1.msra.mxu0 0.0
  %397 = vmatprep.subr.mxu0 0.0
  %398 = vmatpush1.msra.mxu0 0.0
  %399 = vmatprep.subr.mxu0 0.0
  %400 = vmatpush1.msra.mxu0 0.0
  %401 = vmatprep.subr.mxu0 0.0
  %402 = vmatpush1.msra.mxu0 0.0
  %403 = vmatprep.subr.mxu0 0.0
  %404 = vmatpush1.msra.mxu0 0.0
  %405 = vmatprep.subr.mxu0 0.0
  %406 = vmatpush1.msra.mxu0 0.0
  %407 = vmatprep.subr.mxu0 0.0
  %408 = vmatpush1.msra.mxu0 0.0
  %409 = vmatprep.subr.mxu0 0.0
  %410 = vmatpush1.msra.mxu0 0.0
  %411 = vmatprep.mubr.f32.mxu0 0.0
  %412 = vmatmul.mubr.f32.gmra.mrb[0].mxu0 %v345
  %v413 = vpop.f32.mrb[0].mxu0
  %v414 = vadd.f32 0.0, %v413
  %v415 = vpop.f32.mrb[0].mxu0
  %416 = vdwg.mxu0
  %v417 = vadd.f32 %v344, %v414
  %v418 = vxor.u32 %v417, 2147483648
  %v419 = vmul.f32 %v418, 1.442695
  %v420 = vpow.pop %v419
  %v421 = vadd.f32 %v420, 1.0
  %v422 = vrcp.pop %v421
  %v423 = vmul.f32 1.0, %v422
  %v424 = vtanh.pop %v417
  %v425 = vmul.f32 %v423, %v330
  %427 = vrot.lane.b32.xlu0 %v424, 64
  %v428 = vpop.permute.xlu0 %427
  %v430 = vmul.f32 %v423, %v428
  %432 = vrot.lane.b32.xlu0 %v430, 32
  %v433 = vpop.permute.xlu0 %432
  %v435 = vadd.f32 %v425, %v433
  %v436 = vtanh.pop %v435
  %438 = vrot.lane.b32.xlu0 %v436, 64
  %v439 = vpop.permute.xlu0 %438
  %v441 = vmul.f32 %v423, %v439
  %443 = vrot.lane.b32.xlu0 %v441, 32
  %v444 = vpop.permute.xlu0 %443
  %s446 = scalar_lea.vmem %s2, 24
  %447 = vst.msk [vmem:[%s446] sm:$0xff] %vm25, %v444
  %s448 = scalar_lea.vmem %s0, 32
  %v449 = vld [vmem:[%s448] sm:$0xff]
  %v450 = vsel %vm25, %v444, 0
  %452 = vmatprep.subr.mxu0 0.0
  %453 = vmatpush1.msra.mxu0 %v18
  %454 = vmatprep.subr.mxu0 0.0
  %455 = vmatpush1.msra.mxu0 %v19
  %456 = vmatprep.subr.mxu0 0.0
  %457 = vmatpush1.msra.mxu0 %v20
  %458 = vmatprep.subr.mxu0 0.0
  %459 = vmatpush1.msra.mxu0 %v21
  %460 = vmatprep.subr.mxu0 0.0
  %461 = vmatpush1.msra.mxu0 0.0
  %462 = vmatprep.subr.mxu0 0.0
  %463 = vmatpush1.msra.mxu0 0.0
  %464 = vmatprep.subr.mxu0 0.0
  %465 = vmatpush1.msra.mxu0 0.0
  %466 = vmatprep.subr.mxu0 0.0
  %467 = vmatpush1.msra.mxu0 0.0
  %468 = vmatprep.subr.mxu0 0.0
  %469 = vmatpush1.msra.mxu0 0.0
  %470 = vmatprep.subr.mxu0 0.0
  %471 = vmatpush1.msra.mxu0 0.0
  %472 = vmatprep.subr.mxu0 0.0
  %473 = vmatpush1.msra.mxu0 0.0
  %474 = vmatprep.subr.mxu0 0.0
  %475 = vmatpush1.msra.mxu0 0.0
  %476 = vmatprep.subr.mxu0 0.0
  %477 = vmatpush1.msra.mxu0 0.0
  %478 = vmatprep.subr.mxu0 0.0
  %479 = vmatpush1.msra.mxu0 0.0
  %480 = vmatprep.subr.mxu0 0.0
  %481 = vmatpush1.msra.mxu0 0.0
  %482 = vmatprep.subr.mxu0 0.0
  %483 = vmatpush1.msra.mxu0 0.0
  %484 = vmatprep.subr.mxu0 0.0
  %485 = vmatpush1.msra.mxu0 0.0
  %486 = vmatprep.subr.mxu0 0.0
  %487 = vmatpush1.msra.mxu0 0.0
  %488 = vmatprep.subr.mxu0 0.0
  %489 = vmatpush1.msra.mxu0 0.0
  %490 = vmatprep.subr.mxu0 0.0
  %491 = vmatpush1.msra.mxu0 0.0
  %492 = vmatprep.subr.mxu0 0.0
  %493 = vmatpush1.msra.mxu0 0.0
  %494 = vmatprep.subr.mxu0 0.0
  %495 = vmatpush1.msra.mxu0 0.0
  %496 = vmatprep.subr.mxu0 0.0
  %497 = vmatpush1.msra.mxu0 0.0
  %498 = vmatprep.subr.mxu0 0.0
  %499 = vmatpush1.msra.mxu0 0.0
  %500 = vmatprep.subr.mxu0 0.0
  %501 = vmatpush1.msra.mxu0 0.0
  %502 = vmatprep.subr.mxu0 0.0
  %503 = vmatpush1.msra.mxu0 0.0
  %504 = vmatprep.subr.mxu0 0.0
  %505 = vmatpush1.msra.mxu0 0.0
  %506 = vmatprep.subr.mxu0 0.0
  %507 = vmatpush1.msra.mxu0 0.0
  %508 = vmatprep.subr.mxu0 0.0
  %509 = vmatpush1.msra.mxu0 0.0
  %510 = vmatprep.subr.mxu0 0.0
  %511 = vmatpush1.msra.mxu0 0.0
  %512 = vmatprep.subr.mxu0 0.0
  %513 = vmatpush1.msra.mxu0 0.0
  %514 = vmatprep.subr.mxu0 0.0
  %515 = vmatpush1.msra.mxu0 0.0
  %516 = vmatprep.mubr.f32.mxu0 0.0
  %517 = vmatmul.mubr.f32.gmra.mrb[0].mxu0 %v450
  %v518 = vpop.f32.mrb[0].mxu0
  %v519 = vadd.f32 0.0, %v518
  %v520 = vpop.f32.mrb[0].mxu0
  %521 = vdwg.mxu0
  %v522 = vadd.f32 %v449, %v519
  %v523 = vxor.u32 %v522, 2147483648
  %v524 = vmul.f32 %v523, 1.442695
  %v525 = vpow.pop %v524
  %v526 = vadd.f32 %v525, 1.0
  %v527 = vrcp.pop %v526
  %v528 = vmul.f32 1.0, %v527
  %v529 = vtanh.pop %v522
  %v530 = vmul.f32 %v528, %v435
  %532 = vrot.lane.b32.xlu0 %v529, 64
  %v533 = vpop.permute.xlu0 %532
  %v535 = vmul.f32 %v528, %v533
  %537 = vrot.lane.b32.xlu0 %v535, 32
  %v538 = vpop.permute.xlu0 %537
  %v540 = vadd.f32 %v530, %v538
  %v541 = vtanh.pop %v540
  %543 = vrot.lane.b32.xlu0 %v541, 64
  %v544 = vpop.permute.xlu0 %543
  %v546 = vmul.f32 %v528, %v544
  %548 = vrot.lane.b32.xlu0 %v546, 32
  %v549 = vpop.permute.xlu0 %548
  %s551 = scalar_lea.vmem %s2, 32
  %552 = vst.msk [vmem:[%s551] sm:$0xff] %vm25, %v549
  %s553 = scalar_lea.vmem %s0, 40
  %v554 = vld [vmem:[%s553] sm:$0xff]
  %v555 = vsel %vm25, %v549, 0
  %557 = vmatprep.subr.mxu0 0.0
  %558 = vmatpush1.msra.mxu0 %v18
  %559 = vmatprep.subr.mxu0 0.0
  %560 = vmatpush1.msra.mxu0 %v19
  %561 = vmatprep.subr.mxu0 0.0
  %562 = vmatpush1.msra.mxu0 %v20
  %563 = vmatprep.subr.mxu0 0.0
  %564 = vmatpush1.msra.mxu0 %v21
  %565 = vmatprep.subr.mxu0 0.0
  %566 = vmatpush1.msra.mxu0 0.0
  %567 = vmatprep.subr.mxu0 0.0
  %568 = vmatpush1.msra.mxu0 0.0
  %569 = vmatprep.subr.mxu0 0.0
  %570 = vmatpush1.msra.mxu0 0.0
  %571 = vmatprep.subr.mxu0 0.0
  %572 = vmatpush1.msra.mxu0 0.0
  %573 = vmatprep.subr.mxu0 0.0
  %574 = vmatpush1.msra.mxu0 0.0
  %575 = vmatprep.subr.mxu0 0.0
  %576 = vmatpush1.msra.mxu0 0.0
  %577 = vmatprep.subr.mxu0 0.0
  %578 = vmatpush1.msra.mxu0 0.0
  %579 = vmatprep.subr.mxu0 0.0
  %580 = vmatpush1.msra.mxu0 0.0
  %581 = vmatprep.subr.mxu0 0.0
  %582 = vmatpush1.msra.mxu0 0.0
  %583 = vmatprep.subr.mxu0 0.0
  %584 = vmatpush1.msra.mxu0 0.0
  %585 = vmatprep.subr.mxu0 0.0
  %586 = vmatpush1.msra.mxu0 0.0
  %587 = vmatprep.subr.mxu0 0.0
  %588 = vmatpush1.msra.mxu0 0.0
  %589 = vmatprep.subr.mxu0 0.0
  %590 = vmatpush1.msra.mxu0 0.0
  %591 = vmatprep.subr.mxu0 0.0
  %592 = vmatpush1.msra.mxu0 0.0
  %593 = vmatprep.subr.mxu0 0.0
  %594 = vmatpush1.msra.mxu0 0.0
  %595 = vmatprep.subr.mxu0 0.0
  %596 = vmatpush1.msra.mxu0 0.0
  %597 = vmatprep.subr.mxu0 0.0
  %598 = vmatpush1.msra.mxu0 0.0
  %599 = vmatprep.subr.mxu0 0.0
  %600 = vmatpush1.msra.mxu0 0.0
  %601 = vmatprep.subr.mxu0 0.0
  %602 = vmatpush1.msra.mxu0 0.0
  %603 = vmatprep.subr.mxu0 0.0
  %604 = vmatpush1.msra.mxu0 0.0
  %605 = vmatprep.subr.mxu0 0.0
  %606 = vmatpush1.msra.mxu0 0.0
  %607 = vmatprep.subr.mxu0 0.0
  %608 = vmatpush1.msra.mxu0 0.0
  %609 = vmatprep.subr.mxu0 0.0
  %610 = vmatpush1.msra.mxu0 0.0
  %611 = vmatprep.subr.mxu0 0.0
  %612 = vmatpush1.msra.mxu0 0.0
  %613 = vmatprep.subr.mxu0 0.0
  %614 = vmatpush1.msra.mxu0 0.0
  %615 = vmatprep.subr.mxu0 0.0
  %616 = vmatpush1.msra.mxu0 0.0
  %617 = vmatprep.subr.mxu0 0.0
  %618 = vmatpush1.msra.mxu0 0.0
  %619 = vmatprep.subr.mxu0 0.0
  %620 = vmatpush1.msra.mxu0 0.0
  %621 = vmatprep.mubr.f32.mxu0 0.0
  %622 = vmatmul.mubr.f32.gmra.mrb[0].mxu0 %v555
  %v623 = vpop.f32.mrb[0].mxu0
  %v624 = vadd.f32 0.0, %v623
  %v625 = vpop.f32.mrb[0].mxu0
  %626 = vdwg.mxu0
  %v627 = vadd.f32 %v554, %v624
  %v628 = vxor.u32 %v627, 2147483648
  %v629 = vmul.f32 %v628, 1.442695
  %v630 = vpow.pop %v629
  %v631 = vadd.f32 %v630, 1.0
  %v632 = vrcp.pop %v631
  %v633 = vmul.f32 1.0, %v632
  %v634 = vtanh.pop %v627
  %v635 = vmul.f32 %v633, %v540
  %637 = vrot.lane.b32.xlu0 %v634, 64
  %v638 = vpop.permute.xlu0 %637
  %v640 = vmul.f32 %v633, %v638
  %642 = vrot.lane.b32.xlu0 %v640, 32
  %v643 = vpop.permute.xlu0 %642
  %v645 = vadd.f32 %v635, %v643
  %v646 = vtanh.pop %v645
  %648 = vrot.lane.b32.xlu0 %v646, 64
  %v649 = vpop.permute.xlu0 %648
  %v651 = vmul.f32 %v633, %v649
  %653 = vrot.lane.b32.xlu0 %v651, 32
  %v654 = vpop.permute.xlu0 %653
  %s656 = scalar_lea.vmem %s2, 40
  %657 = vst.msk [vmem:[%s656] sm:$0xff] %vm25, %v654
  %s658 = scalar_lea.vmem %s0, 48
  %v659 = vld [vmem:[%s658] sm:$0xff]
  %v660 = vsel %vm25, %v654, 0
  %662 = vmatprep.subr.mxu0 0.0
  %663 = vmatpush1.msra.mxu0 %v18
  %664 = vmatprep.subr.mxu0 0.0
  %665 = vmatpush1.msra.mxu0 %v19
  %666 = vmatprep.subr.mxu0 0.0
  %667 = vmatpush1.msra.mxu0 %v20
  %668 = vmatprep.subr.mxu0 0.0
  %669 = vmatpush1.msra.mxu0 %v21
  %670 = vmatprep.subr.mxu0 0.0
  %671 = vmatpush1.msra.mxu0 0.0
  %672 = vmatprep.subr.mxu0 0.0
  %673 = vmatpush1.msra.mxu0 0.0
  %674 = vmatprep.subr.mxu0 0.0
  %675 = vmatpush1.msra.mxu0 0.0
  %676 = vmatprep.subr.mxu0 0.0
  %677 = vmatpush1.msra.mxu0 0.0
  %678 = vmatprep.subr.mxu0 0.0
  %679 = vmatpush1.msra.mxu0 0.0
  %680 = vmatprep.subr.mxu0 0.0
  %681 = vmatpush1.msra.mxu0 0.0
  %682 = vmatprep.subr.mxu0 0.0
  %683 = vmatpush1.msra.mxu0 0.0
  %684 = vmatprep.subr.mxu0 0.0
  %685 = vmatpush1.msra.mxu0 0.0
  %686 = vmatprep.subr.mxu0 0.0
  %687 = vmatpush1.msra.mxu0 0.0
  %688 = vmatprep.subr.mxu0 0.0
  %689 = vmatpush1.msra.mxu0 0.0
  %690 = vmatprep.subr.mxu0 0.0
  %691 = vmatpush1.msra.mxu0 0.0
  %692 = vmatprep.subr.mxu0 0.0
  %693 = vmatpush1.msra.mxu0 0.0
  %694 = vmatprep.subr.mxu0 0.0
  %695 = vmatpush1.msra.mxu0 0.0
  %696 = vmatprep.subr.mxu0 0.0
  %697 = vmatpush1.msra.mxu0 0.0
  %698 = vmatprep.subr.mxu0 0.0
  %699 = vmatpush1.msra.mxu0 0.0
  %700 = vmatprep.subr.mxu0 0.0
  %701 = vmatpush1.msra.mxu0 0.0
  %702 = vmatprep.subr.mxu0 0.0
  %703 = vmatpush1.msra.mxu0 0.0
  %704 = vmatprep.subr.mxu0 0.0
  %705 = vmatpush1.msra.mxu0 0.0
  %706 = vmatprep.subr.mxu0 0.0
  %707 = vmatpush1.msra.mxu0 0.0
  %708 = vmatprep.subr.mxu0 0.0
  %709 = vmatpush1.msra.mxu0 0.0
  %710 = vmatprep.subr.mxu0 0.0
  %711 = vmatpush1.msra.mxu0 0.0
  %712 = vmatprep.subr.mxu0 0.0
  %713 = vmatpush1.msra.mxu0 0.0
  %714 = vmatprep.subr.mxu0 0.0
  %715 = vmatpush1.msra.mxu0 0.0
  %716 = vmatprep.subr.mxu0 0.0
  %717 = vmatpush1.msra.mxu0 0.0
  %718 = vmatprep.subr.mxu0 0.0
  %719 = vmatpush1.msra.mxu0 0.0
  %720 = vmatprep.subr.mxu0 0.0
  %721 = vmatpush1.msra.mxu0 0.0
  %722 = vmatprep.subr.mxu0 0.0
  %723 = vmatpush1.msra.mxu0 0.0
  %724 = vmatprep.subr.mxu0 0.0
  %725 = vmatpush1.msra.mxu0 0.0
  %726 = vmatprep.mubr.f32.mxu0 0.0
  %727 = vmatmul.mubr.f32.gmra.mrb[0].mxu0 %v660
  %v728 = vpop.f32.mrb[0].mxu0
  %v729 = vadd.f32 0.0, %v728
  %v730 = vpop.f32.mrb[0].mxu0
  %731 = vdwg.mxu0
  %v732 = vadd.f32 %v659, %v729
  %v733 = vxor.u32 %v732, 2147483648
  %v734 = vmul.f32 %v733, 1.442695
  %v735 = vpow.pop %v734
  %v736 = vadd.f32 %v735, 1.0
  %v737 = vrcp.pop %v736
  %v738 = vmul.f32 1.0, %v737
  %v739 = vtanh.pop %v732
  %v740 = vmul.f32 %v738, %v645
  %742 = vrot.lane.b32.xlu0 %v739, 64
  %v743 = vpop.permute.xlu0 %742
  %v745 = vmul.f32 %v738, %v743
  %747 = vrot.lane.b32.xlu0 %v745, 32
  %v748 = vpop.permute.xlu0 %747
  %v750 = vadd.f32 %v740, %v748
  %v751 = vtanh.pop %v750
  %753 = vrot.lane.b32.xlu0 %v751, 64
  %v754 = vpop.permute.xlu0 %753
  %v756 = vmul.f32 %v738, %v754
  %758 = vrot.lane.b32.xlu0 %v756, 32
  %v759 = vpop.permute.xlu0 %758
  %s761 = scalar_lea.vmem %s2, 48
  %762 = vst.msk [vmem:[%s761] sm:$0xff] %vm25, %v759
  %s763 = scalar_lea.vmem %s0, 56
  %v764 = vld [vmem:[%s763] sm:$0xff]
  %v765 = vsel %vm25, %v759, 0
  %767 = vmatprep.subr.mxu0 0.0
  %768 = vmatpush1.msra.mxu0 %v18
  %769 = vmatprep.subr.mxu0 0.0
  %770 = vmatpush1.msra.mxu0 %v19
  %771 = vmatprep.subr.mxu0 0.0
  %772 = vmatpush1.msra.mxu0 %v20
  %773 = vmatprep.subr.mxu0 0.0
  %774 = vmatpush1.msra.mxu0 %v21
  %775 = vmatprep.subr.mxu0 0.0
  %776 = vmatpush1.msra.mxu0 0.0
  %777 = vmatprep.subr.mxu0 0.0
  %778 = vmatpush1.msra.mxu0 0.0
  %779 = vmatprep.subr.mxu0 0.0
  %780 = vmatpush1.msra.mxu0 0.0
  %781 = vmatprep.subr.mxu0 0.0
  %782 = vmatpush1.msra.mxu0 0.0
  %783 = vmatprep.subr.mxu0 0.0
  %784 = vmatpush1.msra.mxu0 0.0
  %785 = vmatprep.subr.mxu0 0.0
  %786 = vmatpush1.msra.mxu0 0.0
  %787 = vmatprep.subr.mxu0 0.0
  %788 = vmatpush1.msra.mxu0 0.0
  %789 = vmatprep.subr.mxu0 0.0
  %790 = vmatpush1.msra.mxu0 0.0
  %791 = vmatprep.subr.mxu0 0.0
  %792 = vmatpush1.msra.mxu0 0.0
  %793 = vmatprep.subr.mxu0 0.0
  %794 = vmatpush1.msra.mxu0 0.0
  %795 = vmatprep.subr.mxu0 0.0
  %796 = vmatpush1.msra.mxu0 0.0
  %797 = vmatprep.subr.mxu0 0.0
  %798 = vmatpush1.msra.mxu0 0.0
  %799 = vmatprep.subr.mxu0 0.0
  %800 = vmatpush1.msra.mxu0 0.0
  %801 = vmatprep.subr.mxu0 0.0
  %802 = vmatpush1.msra.mxu0 0.0
  %803 = vmatprep.subr.mxu0 0.0
  %804 = vmatpush1.msra.mxu0 0.0
  %805 = vmatprep.subr.mxu0 0.0
  %806 = vmatpush1.msra.mxu0 0.0
  %807 = vmatprep.subr.mxu0 0.0
  %808 = vmatpush1.msra.mxu0 0.0
  %809 = vmatprep.subr.mxu0 0.0
  %810 = vmatpush1.msra.mxu0 0.0
  %811 = vmatprep.subr.mxu0 0.0
  %812 = vmatpush1.msra.mxu0 0.0
  %813 = vmatprep.subr.mxu0 0.0
  %814 = vmatpush1.msra.mxu0 0.0
  %815 = vmatprep.subr.mxu0 0.0
  %816 = vmatpush1.msra.mxu0 0.0
  %817 = vmatprep.subr.mxu0 0.0
  %818 = vmatpush1.msra.mxu0 0.0
  %819 = vmatprep.subr.mxu0 0.0
  %820 = vmatpush1.msra.mxu0 0.0
  %821 = vmatprep.subr.mxu0 0.0
  %822 = vmatpush1.msra.mxu0 0.0
  %823 = vmatprep.subr.mxu0 0.0
  %824 = vmatpush1.msra.mxu0 0.0
  %825 = vmatprep.subr.mxu0 0.0
  %826 = vmatpush1.msra.mxu0 0.0
  %827 = vmatprep.subr.mxu0 0.0
  %828 = vmatpush1.msra.mxu0 0.0
  %829 = vmatprep.subr.mxu0 0.0
  %830 = vmatpush1.msra.mxu0 0.0
  %831 = vmatprep.mubr.f32.mxu0 0.0
  %832 = vmatmul.mubr.f32.gmra.mrb[0].mxu0 %v765
  %v833 = vpop.f32.mrb[0].mxu0
  %v834 = vadd.f32 0.0, %v833
  %v835 = vpop.f32.mrb[0].mxu0
  %836 = vdwg.mxu0
  %v837 = vadd.f32 %v764, %v834
  %v838 = vxor.u32 %v837, 2147483648
  %v839 = vmul.f32 %v838, 1.442695
  %v840 = vpow.pop %v839
  %v841 = vadd.f32 %v840, 1.0
  %v842 = vrcp.pop %v841
  %v843 = vmul.f32 1.0, %v842
  %v844 = vtanh.pop %v837
  %v845 = vmul.f32 %v843, %v750
  %847 = vrot.lane.b32.xlu0 %v844, 64
  %v848 = vpop.permute.xlu0 %847
  %v850 = vmul.f32 %v843, %v848
  %852 = vrot.lane.b32.xlu0 %v850, 32
  %v853 = vpop.permute.xlu0 %852
  %v855 = vadd.f32 %v845, %v853
  %v856 = vtanh.pop %v855
  %858 = vrot.lane.b32.xlu0 %v856, 64
  %v859 = vpop.permute.xlu0 %858
  %v861 = vmul.f32 %v843, %v859
  %863 = vrot.lane.b32.xlu0 %v861, 32
  %v864 = vpop.permute.xlu0 %863
  %s866 = scalar_lea.vmem %s2, 56
  %867 = vst.msk [vmem:[%s866] sm:$0xff] %vm25, %v864
  %868 = vst.msk [vmem:[#allocation2] sm:$0xff] %vm25, %v864
  %870 = vrot.lane.b32.xlu0 %v855, 96
  %v871 = vpop.permute.xlu0 %870
  %873 = vst.msk [vmem:[#allocation3] sm:$0xff] %vm25, %v871
  // Predicated region
  $region14: #{lstm4graph_forward.2} parent=0 // pred_check
    _
  $region15: #{lstm4graph_forward.2} parent=0 // pred_check_branch
    %875 = sbr.rel (0) target = $region17
  $region16: #{lstm4graph_forward.2} parent=0 // pred_region
    _
  $region17: #{lstm4graph_forward.2} parent=0 // pred_fallthru
    _
  // Predicated region
  $region18: #{lstm4graph_forward.2} parent=0 // pred_check
    _
  $region19: #{lstm4graph_forward.2} parent=0 // pred_check_branch
    %877 = sbr.rel (0) target = $region21
  $region20: #{lstm4graph_forward.2} parent=0 // pred_region
    _
  $region21: #{lstm4graph_forward.2} parent=0 // pred_fallthru
    _

</llo_original>
